<compile_context>
chip_gen: v7x
topology: tpu7x:2x2x1
jax: 0.10.0
libtpu: 0.0.40
codegen_flags: <defaults>
</compile_context>

<pallas_src>
import jax
import jax.numpy as jnp
from jax.experimental import pallas as pl
from jax.experimental.pallas import tpu as pltpu


def _hetero_rgcn_kernel(dst_slot_ref, src_slot_ref, first_ref,
                        a_ref, x_ref, wt_ref, b_ref, inv_ref,
                        out_ref):
    """One grid step == one canonical etype.

    a_ref  : [N_max, N_max]   raw 0/1 adjacency (dst x src), bf16, zero-padded
    x_ref  : [N_max, in]      source-ntype features, bf16, zero-padded rows
    wt_ref : [in, OUT_PAD]    W_e^T, bf16, zero-padded lanes
    b_ref  : [1, OUT_PAD]     bias, f32, zero-padded lanes
    inv_ref: [N_max, 1]       1/in_degree (0 where degree == 0), f32
    out_ref: [N_max, OUT_PAD] f32 accumulator for the current dst ntype (resident
                              across consecutive etypes with the same dst).
    """
    e = pl.program_id(0)

    # Zero the resident output block at the first etype of each dst-ntype group.
    @pl.when(first_ref[e] == 1)
    def _():
        out_ref[...] = jnp.zeros_like(out_ref)

    # Linear: Wh = X_src @ W^T  (bf16 MXU inputs, f32 accumulation, lane-dense N=128).
    wh = jnp.dot(x_ref[...], wt_ref[...], preferred_element_type=jnp.float32)

    # Mean aggregation fused: (A_raw @ Wh) * (1/deg); zero-degree rows stay 0.
    agg = jnp.dot(a_ref[...], wh.astype(jnp.bfloat16),
                  preferred_element_type=jnp.float32)
    inv = inv_ref[...]                                    # [N_max, 1]
    deg_mask = (inv > 0.0).astype(jnp.float32)            # 1 where in-degree > 0
    contrib = agg * inv + b_ref[...] * deg_mask           # bias only where deg > 0

    # multi_update_all(..., 'sum'): accumulate across etypes sharing this dst ntype.
    out_ref[...] += contrib


def hetero_rgcn_layer(canonical_etypes, adjacency, feat_dict, params):
    """canonical_etypes: list of (srctype, etype, dsttype)
       adjacency[etype]: dense [N_dst, N_src] 0/1 matrix
       feat_dict[ntype]: [N_ntype, in_size]
       params[etype]   : (W [out,in], b [out])   (PyTorch nn.Linear layout)
    Returns {dst ntype: [N_ntype, out_size]} (float32)."""
    ntypes = sorted(feat_dict.keys())
    nt_index = {nt: i for i, nt in enumerate(ntypes)}
    n_nodes = {nt: feat_dict[nt].shape[0] for nt in ntypes}
    in_size = next(iter(feat_dict.values())).shape[1]
    out_size = next(iter(params.values()))[0].shape[0]

    n_max = max(n_nodes.values())
    n_max = (n_max + 7) // 8 * 8                      # sublane-aligned node padding
    out_pad = max(128, (out_size + 127) // 128 * 128)  # lane-dense output width

    # Order etypes so those with the same dst ntype are consecutive (accumulator runs).
    ordered = []
    for d in ntypes:
        for (s, e, dd) in canonical_etypes:
            if dd == d:
                ordered.append((s, e, dd))
    n_et = len(ordered)

    # Host-side packing (tiny arrays; padded + cast once, no normalized copy of A).
    a_stk = jnp.zeros((n_et, n_max, n_max), jnp.bfloat16)
    wt_stk = jnp.zeros((n_et, in_size, out_pad), jnp.bfloat16)
    b_stk = jnp.zeros((n_et, 1, out_pad), jnp.float32)
    inv_stk = jnp.zeros((n_et, n_max, 1), jnp.float32)
    x_stk = jnp.zeros((len(ntypes), n_max, in_size), jnp.bfloat16)

    dst_slot, src_slot, first = [], [], []
    seen_dst = set()
    for i, (s, e, d) in enumerate(ordered):
        a = adjacency[e].astype(jnp.float32)           # raw [n_dst, n_src] 0/1
        nd, ns = a.shape
        deg = a.sum(axis=1, keepdims=True)
        inv = jnp.where(deg > 0, 1.0 / jnp.maximum(deg, 1.0), 0.0)
        w, b = params[e]
        a_stk = a_stk.at[i, :nd, :ns].set(a.astype(jnp.bfloat16))
        inv_stk = inv_stk.at[i, :nd, :].set(inv)
        wt_stk = wt_stk.at[i, :, :out_size].set(w.T.astype(jnp.bfloat16))
        b_stk = b_stk.at[i, 0, :out_size].set(b.astype(jnp.float32))
        dst_slot.append(nt_index[d])
        src_slot.append(nt_index[s])
        first.append(1 if d not in seen_dst else 0)
        seen_dst.add(d)

    for nt in ntypes:
        x_stk = x_stk.at[nt_index[nt], :n_nodes[nt], :].set(
            feat_dict[nt].astype(jnp.bfloat16))

    dst_slot = jnp.asarray(dst_slot, jnp.int32)
    src_slot = jnp.asarray(src_slot, jnp.int32)
    first = jnp.asarray(first, jnp.int32)

    out = pl.pallas_call(
        _hetero_rgcn_kernel,
        out_shape=jax.ShapeDtypeStruct((len(ntypes), n_max, out_pad), jnp.float32),
        grid_spec=pltpu.PrefetchScalarGridSpec(
            num_scalar_prefetch=3,
            grid=(n_et,),
            in_specs=[
                # adjacency for etype e
                pl.BlockSpec((None, n_max, n_max), lambda e, d, s, f: (e, 0, 0)),
                # features of the source ntype of etype e (scalar-prefetch indexed)
                pl.BlockSpec((None, n_max, in_size), lambda e, d, s, f: (s[e], 0, 0)),
                # W^T for etype e
                pl.BlockSpec((None, in_size, out_pad), lambda e, d, s, f: (e, 0, 0)),
                # bias for etype e
                pl.BlockSpec((None, 1, out_pad), lambda e, d, s, f: (e, 0, 0)),
                # inverse in-degree for etype e
                pl.BlockSpec((None, n_max, 1), lambda e, d, s, f: (e, 0, 0)),
            ],
            # output block of the destination ntype of etype e (resident across the
            # consecutive etypes that share this dst -> in-VMEM cross-etype sum).
            out_specs=pl.BlockSpec((None, n_max, out_pad),
                                   lambda e, d, s, f: (d[e], 0, 0)),
        ),
        compiler_params=pltpu.CompilerParams(
            dimension_semantics=("arbitrary",)),
    )(dst_slot, src_slot, first, a_stk, x_stk, wt_stk, b_stk, inv_stk)

    results = {}
    for (_, _, d) in ordered:
        if d not in results:
            results[d] = out[nt_index[d], :n_nodes[d], :out_size]
    return results


if __name__ == "__main__":
    key = jax.random.PRNGKey(0)
    in_size, out_size = 32, 32
    n_paper, n_author, n_subject = 64, 40, 8

    # Synthetic heterogeneous graph (stand-in for ACM.mat; no file IO).
    k_pa, k_pp, k_pl, k_feat, k_w = jax.random.split(key, 5)
    PvsA = jax.random.bernoulli(k_pa, 0.1, (n_paper, n_author)).astype(jnp.float32)
    PvsP = jax.random.bernoulli(k_pp, 0.05, (n_paper, n_paper)).astype(jnp.float32)
    PvsL = jax.random.bernoulli(k_pl, 0.2, (n_paper, n_subject)).astype(jnp.float32)

    canonical_etypes = [
        ("paper", "written-by", "author"),
        ("author", "writing", "paper"),
        ("paper", "citing", "paper"),
        ("paper", "cited", "paper"),
        ("paper", "is-about", "subject"),
        ("subject", "has", "paper"),
    ]
    # adjacency[etype] is [N_dst, N_src]
    adjacency = {
        "written-by": PvsA.T,   # author  <- paper
        "writing":    PvsA,     # paper   <- author
        "citing":     PvsP.T,   # paper   <- paper (dst x src)
        "cited":      PvsP,     # paper   <- paper
        "is-about":   PvsL.T,   # subject <- paper
        "has":        PvsL,     # paper   <- subject
    }

    # Node features.
    kf = jax.random.split(k_feat, 3)
    feat_dict = {
        "paper":   jax.random.normal(kf[0], (n_paper, in_size), jnp.float32),
        "author":  jax.random.normal(kf[1], (n_author, in_size), jnp.float32),
        "subject": jax.random.normal(kf[2], (n_subject, in_size), jnp.float32),
    }

    # Deterministic per-etype Linear parameters (nn.Linear(in_size, out_size)).
    etypes = [e for _, e, _ in canonical_etypes]
    kws = jax.random.split(k_w, 2 * len(etypes))
    params = {}
    for i, e in enumerate(etypes):
        w = jax.random.normal(kws[2 * i], (out_size, in_size), jnp.float32) * 0.1
        b = jax.random.normal(kws[2 * i + 1], (out_size,), jnp.float32) * 0.01
        params[e] = (w, b)

    result = hetero_rgcn_layer(canonical_etypes, adjacency, feat_dict, params)
    result = jax.block_until_ready(result)

    # --- Reference 1: bf16-matched pure-JAX reference (tight tolerance) ---------------
    ref_bf = {}
    for srctype, etype, dsttype in canonical_etypes:
        a = adjacency[etype].astype(jnp.float32)
        deg = a.sum(axis=1, keepdims=True)
        inv = jnp.where(deg > 0, 1.0 / jnp.maximum(deg, 1.0), 0.0)
        w, b = params[etype]
        wh = jnp.dot(feat_dict[srctype].astype(jnp.bfloat16),
                     w.T.astype(jnp.bfloat16),
                     preferred_element_type=jnp.float32)
        agg = jnp.dot(a.astype(jnp.bfloat16), wh.astype(jnp.bfloat16),
                      preferred_element_type=jnp.float32)
        h_e = agg * inv + b * (inv > 0).astype(jnp.float32)
        ref_bf[dsttype] = h_e if dsttype not in ref_bf else ref_bf[dsttype] + h_e
    for nt in result:
        assert jnp.allclose(result[nt], ref_bf[nt], atol=2e-3, rtol=2e-3), nt

    # --- Reference 2: original f32 semantics (loose tolerance for bf16 MXU inputs) ----
    ref = {}
    for srctype, etype, dsttype in canonical_etypes:
        a = adjacency[etype].astype(jnp.float32)
        deg = a.sum(axis=1, keepdims=True)
        a_norm = jnp.where(deg > 0, a / jnp.maximum(deg, 1.0), 0.0)
        w, b = params[etype]
        h_e = a_norm @ (feat_dict[srctype] @ w.T + b)
        ref[dsttype] = h_e if dsttype not in ref else ref[dsttype] + h_e
    for nt in result:
        assert jnp.allclose(result[nt], ref[nt], atol=5e-2, rtol=5e-2), nt

    print("KERNEL_OK")
</pallas_src>

<mosaic_0001>
module attributes {stable_mosaic.version = 11 : i64} {
  func.func @_hetero_rgcn_kernel(%arg0: i32, %arg1: memref<6xi32, #tpu.memory_space<smem>>, %arg2: memref<6xi32, #tpu.memory_space<smem>>, %arg3: memref<6xi32, #tpu.memory_space<smem>>, %arg4: memref<1x64x64xbf16, #tpu.memory_space<vmem>>, %arg5: memref<1x64x32xbf16, #tpu.memory_space<vmem>>, %arg6: memref<1x32x128xbf16, #tpu.memory_space<vmem>>, %arg7: memref<1x1x128xf32, #tpu.memory_space<vmem>>, %arg8: memref<1x64x1xf32, #tpu.memory_space<vmem>>, %arg9: memref<1x64x128xf32, #tpu.memory_space<vmem>>) attributes {dimension_semantics = [#tpu.dimension_semantics<arbitrary>], iteration_bounds = array<i64: 6>, scalar_prefetch = 3 : i64, scratch_operands = 0 : i64, tpu.core_type = #tpu.core_type<tc>, window_params = [{transform_indices = @transform_0, window_bounds = array<i64: 1, 64, 64>}, {transform_indices = @transform_1, window_bounds = array<i64: 1, 64, 32>}, {transform_indices = @transform_2, window_bounds = array<i64: 1, 32, 128>}, {transform_indices = @transform_3, window_bounds = array<i64: 1, 1, 128>}, {transform_indices = @transform_4, window_bounds = array<i64: 1, 64, 1>}, {transform_indices = @transform_5, window_bounds = array<i64: 1, 64, 128>}]} {
    %0 = arith.index_cast %arg0 : i32 to index
    %1 = memref.load %arg3[%0] : memref<6xi32, #tpu.memory_space<smem>>
    %c1_i32 = arith.constant 1 : i32
    %2 = arith.cmpi eq, %1, %c1_i32 : i32
    %3 = arith.extui %2 : i1 to i32
    %c0_i32 = arith.constant 0 : i32
    %4 = arith.cmpi ne, %3, %c0_i32 : i32
    scf.if %4 {
      %cst_22 = arith.constant 0.000000e+00 : f32
      %34 = vector.broadcast %cst_22 : f32 to vector<64x128xf32>
      %c0_23 = arith.constant 0 : index
      %c0_24 = arith.constant 0 : index
      %c0_25 = arith.constant 0 : index
      %35 = vector.load %arg9[%c0_23, %c0_24, %c0_25] : memref<1x64x128xf32, #tpu.memory_space<vmem>>, vector<1x64x128xf32>
      %36 = vector.shape_cast %35 : vector<1x64x128xf32> to vector<64x128xf32>
      %37 = vector.shape_cast %34 : vector<64x128xf32> to vector<1x64x128xf32>
      tpu.vector_store %arg9[%c0_23, %c0_24, %c0_25], %37 {strides = array<i32>} : memref<1x64x128xf32, #tpu.memory_space<vmem>>, vector<1x64x128xf32>,
    } else {
    }
    %c0 = arith.constant 0 : index
    %c0_0 = arith.constant 0 : index
    %c0_1 = arith.constant 0 : index
    %5 = vector.load %arg5[%c0, %c0_0, %c0_1] : memref<1x64x32xbf16, #tpu.memory_space<vmem>>, vector<1x64x32xbf16>
    %6 = vector.shape_cast %5 : vector<1x64x32xbf16> to vector<64x32xbf16>
    %c0_2 = arith.constant 0 : index
    %c0_3 = arith.constant 0 : index
    %c0_4 = arith.constant 0 : index
    %7 = vector.load %arg6[%c0_2, %c0_3, %c0_4] : memref<1x32x128xbf16, #tpu.memory_space<vmem>>, vector<1x32x128xbf16>
    %8 = vector.shape_cast %7 : vector<1x32x128xbf16> to vector<32x128xbf16>
    %cst = arith.constant dense<0.000000e+00> : vector<64x128xf32>
    %9 = tpu.matmul %6, %8, %cst {dimension_numbers = #tpu.dot_dimension_numbers<[1], [0], [0], [1], [0, 0, 1, 1], [], []>} : vector<64x32xbf16>, vector<32x128xbf16>, vector<64x128xf32> -> vector<64x128xf32>
    %c0_5 = arith.constant 0 : index
    %c0_6 = arith.constant 0 : index
    %c0_7 = arith.constant 0 : index
    %10 = vector.load %arg4[%c0_5, %c0_6, %c0_7] : memref<1x64x64xbf16, #tpu.memory_space<vmem>>, vector<1x64x64xbf16>
    %11 = vector.shape_cast %10 : vector<1x64x64xbf16> to vector<64x64xbf16>
    %12 = arith.truncf %9 : vector<64x128xf32> to vector<64x128xbf16>
    %cst_8 = arith.constant dense<0.000000e+00> : vector<64x128xf32>
    %13 = tpu.matmul %11, %12, %cst_8 {dimension_numbers = #tpu.dot_dimension_numbers<[1], [0], [0], [1], [0, 0, 1, 1], [], []>} : vector<64x64xbf16>, vector<64x128xbf16>, vector<64x128xf32> -> vector<64x128xf32>
    %c0_9 = arith.constant 0 : index
    %c0_10 = arith.constant 0 : index
    %c0_11 = arith.constant 0 : index
    %14 = vector.load %arg8[%c0_9, %c0_10, %c0_11] : memref<1x64x1xf32, #tpu.memory_space<vmem>>, vector<1x64x1xf32>
    %15 = vector.shape_cast %14 : vector<1x64x1xf32> to vector<64x1xf32>
    %cst_12 = arith.constant 0.000000e+00 : f32
    %16 = vector.broadcast %cst_12 : f32 to vector<64x1xf32>
    %17 = arith.cmpf ogt, %15, %16 : vector<64x1xf32>
    %18 = arith.extui %17 : vector<64x1xi1> to vector<64x1xi32>
    %19 = arith.sitofp %18 : vector<64x1xi32> to vector<64x1xf32>
    %20 = vector.broadcast %15 : vector<64x1xf32> to vector<64x128xf32>
    %21 = arith.mulf %13, %20 : vector<64x128xf32>
    %c0_13 = arith.constant 0 : index
    %c0_14 = arith.constant 0 : index
    %c0_15 = arith.constant 0 : index
    %22 = vector.load %arg7[%c0_13, %c0_14, %c0_15] : memref<1x1x128xf32, #tpu.memory_space<vmem>>, vector<1x1x128xf32>
    %23 = vector.shape_cast %22 : vector<1x1x128xf32> to vector<1x128xf32>
    %24 = vector.broadcast %23 : vector<1x128xf32> to vector<64x128xf32>
    %25 = vector.broadcast %19 : vector<64x1xf32> to vector<64x128xf32>
    %26 = arith.mulf %24, %25 : vector<64x128xf32>
    %27 = arith.addf %21, %26 : vector<64x128xf32>
    %c0_16 = arith.constant 0 : index
    %c0_17 = arith.constant 0 : index
    %c0_18 = arith.constant 0 : index
    %28 = vector.load %arg9[%c0_16, %c0_17, %c0_18] : memref<1x64x128xf32, #tpu.memory_space<vmem>>, vector<1x64x128xf32>
    %29 = vector.shape_cast %28 : vector<1x64x128xf32> to vector<64x128xf32>
    %30 = arith.addf %29, %27 : vector<64x128xf32>
    %c0_19 = arith.constant 0 : index
    %c0_20 = arith.constant 0 : index
    %c0_21 = arith.constant 0 : index
    %31 = vector.load %arg9[%c0_19, %c0_20, %c0_21] : memref<1x64x128xf32, #tpu.memory_space<vmem>>, vector<1x64x128xf32>
    %32 = vector.shape_cast %31 : vector<1x64x128xf32> to vector<64x128xf32>
    %33 = vector.shape_cast %30 : vector<64x128xf32> to vector<1x64x128xf32>
    tpu.vector_store %arg9[%c0_19, %c0_20, %c0_21], %33 {strides = array<i32>} : memref<1x64x128xf32, #tpu.memory_space<vmem>>, vector<1x64x128xf32>,
    return
  }
  func.func @transform_0(%arg0: i32, %arg1: memref<6xi32, #tpu.memory_space<smem>>, %arg2: memref<6xi32, #tpu.memory_space<smem>>, %arg3: memref<6xi32, #tpu.memory_space<smem>>) -> (i32, i32, i32) {
    %c0_i32 = arith.constant 0 : i32
    %c0_i32_0 = arith.constant 0 : i32
    %c0_i32_1 = arith.constant 0 : i32
    return %arg0, %c0_i32, %c0_i32_0 : i32, i32, i32
  }
  func.func @transform_1(%arg0: i32, %arg1: memref<6xi32, #tpu.memory_space<smem>>, %arg2: memref<6xi32, #tpu.memory_space<smem>>, %arg3: memref<6xi32, #tpu.memory_space<smem>>) -> (i32, i32, i32) {
    %0 = arith.index_cast %arg0 : i32 to index
    %1 = memref.load %arg2[%0] : memref<6xi32, #tpu.memory_space<smem>>
    %c0_i32 = arith.constant 0 : i32
    %c0_i32_0 = arith.constant 0 : i32
    %c0_i32_1 = arith.constant 0 : i32
    return %1, %c0_i32, %c0_i32_0 : i32, i32, i32
  }
  func.func @transform_2(%arg0: i32, %arg1: memref<6xi32, #tpu.memory_space<smem>>, %arg2: memref<6xi32, #tpu.memory_space<smem>>, %arg3: memref<6xi32, #tpu.memory_space<smem>>) -> (i32, i32, i32) {
    %c0_i32 = arith.constant 0 : i32
    %c0_i32_0 = arith.constant 0 : i32
    %c0_i32_1 = arith.constant 0 : i32
    return %arg0, %c0_i32, %c0_i32_0 : i32, i32, i32
  }
  func.func @transform_3(%arg0: i32, %arg1: memref<6xi32, #tpu.memory_space<smem>>, %arg2: memref<6xi32, #tpu.memory_space<smem>>, %arg3: memref<6xi32, #tpu.memory_space<smem>>) -> (i32, i32, i32) {
    %c0_i32 = arith.constant 0 : i32
    %c0_i32_0 = arith.constant 0 : i32
    %c0_i32_1 = arith.constant 0 : i32
    return %arg0, %c0_i32, %c0_i32_0 : i32, i32, i32
  }
  func.func @transform_4(%arg0: i32, %arg1: memref<6xi32, #tpu.memory_space<smem>>, %arg2: memref<6xi32, #tpu.memory_space<smem>>, %arg3: memref<6xi32, #tpu.memory_space<smem>>) -> (i32, i32, i32) {
    %c0_i32 = arith.constant 0 : i32
    %c0_i32_0 = arith.constant 0 : i32
    %c0_i32_1 = arith.constant 0 : i32
    return %arg0, %c0_i32, %c0_i32_0 : i32, i32, i32
  }
  func.func @transform_5(%arg0: i32, %arg1: memref<6xi32, #tpu.memory_space<smem>>, %arg2: memref<6xi32, #tpu.memory_space<smem>>, %arg3: memref<6xi32, #tpu.memory_space<smem>>) -> (i32, i32, i32) {
    %0 = arith.index_cast %arg0 : i32 to index
    %1 = memref.load %arg1[%0] : memref<6xi32, #tpu.memory_space<smem>>
    %c0_i32 = arith.constant 0 : i32
    %c0_i32_0 = arith.constant 0 : i32
    %c0_i32_1 = arith.constant 0 : i32
    return %1, %c0_i32, %c0_i32_0 : i32, i32, i32
  }
}

</mosaic_0001>

<llo_original>
// kernel: tpu_custom_call.1
$region0: #{tpu_custom_call.1}
  #allocation0 [shape = 'u32[]', space=smem, size = 0x4, offset = 0x4, fixed_abs, tag = 'smem constant byte address 0x4 - core index']
  #allocation1 [shape = 'u32[144,128]{1,0:T(1,128)}', space=vmem, size = 0x12000, scoped, tag = 'internal scratch']
  #allocation2 [shape = 's32[1]{0}', space=sflag, size = 0x4, scoped, tag = 'scoped memory for tpu_custom_call.1']
  #allocation3 [shape = 'u8[512]{0}', space=smem, size = 0x200, scoped, tag = 'prefetched SMEM operand 0']
  #allocation4 [shape = 'u8[512]{0}', space=smem, size = 0x200, scoped, tag = 'prefetched SMEM operand 1']
  #allocation5 [shape = 'u8[512]{0}', space=smem, size = 0x200, scoped, tag = 'prefetched SMEM operand 2']
  %s0 = inlined_call_operand.vmem [shape: s32[6], index: 0, kind: input, shape index: {}]
  %s1 = inlined_call_operand.vmem [shape: s32[6], index: 1, kind: input, shape index: {}]
  %s2 = inlined_call_operand.vmem [shape: s32[6], index: 2, kind: input, shape index: {}]
  %s3 = inlined_call_operand.vmem [shape: bf16[6,64,64], index: 3, kind: input, shape index: {}]
  %s4 = inlined_call_operand.vmem [shape: bf16[3,64,32], index: 4, kind: input, shape index: {}]
  %s5 = inlined_call_operand.vmem [shape: bf16[6,32,128], index: 5, kind: input, shape index: {}]
  %s6 = inlined_call_operand.vmem [shape: f32[6,1,128], index: 6, kind: input, shape index: {}]
  %s7 = inlined_call_operand.vmem [shape: f32[6,64,1], index: 7, kind: input, shape index: {}]
  %s8 = inlined_call_operand.hbm [shape: f32[3,64,128], index: 8, kind: output, shape index: {}]
  %s9 = sld [smem:[#allocation0]]
  $region57: #{tpu_custom_call.1} parent=0
    _
  %s11 = ssub.s32 1, %s9
  %s12 = scalar_select 0, %s11, %s9
  %s13 = sshll.u32 %s0, 4
  %s14 = int_to_ptr.vmem [resolvable:$true] %s13
  %16 = dma.vmem_to_smem %s14, 16, [#allocation3], [#allocation2]
  %s17 = sshll.u32 %s1, 4
  %s18 = int_to_ptr.vmem [resolvable:$true] %s17
  %20 = dma.vmem_to_smem %s18, 16, [#allocation4], [#allocation2]
  %s21 = sshll.u32 %s2, 4
  %s22 = int_to_ptr.vmem [resolvable:$true] %s21
  %24 = dma.vmem_to_smem %s22, 16, [#allocation5], [#allocation2]
  %25 = dma.done [#allocation2], 48
  %26 = sfence
  $region1: #{tpu_custom_call.1} parent=0
    #allocation6 [shape = 'u8[65536]{0}', space=vmem, size = 0x10000, scoped, tag = 'output window, operand 0']
    #allocation7 [shape = 's32[2]{0}', space=sflag, size = 0x8, scoped, tag = 'scoped memory for tpu_custom_call.1']
    %27 = vsyncpa [#allocation7], 0
    %s28 = scalar_lea.sflag [#allocation7], 1
    %29 = vsyncpa %s28, 0
    loop: start=0, step=1, limit=8
    $region2: #{tpu_custom_call.1} parent=1 // loop_pre_header
      _
    $region3: #{tpu_custom_call.1} parent=1 // loop_header
      %s31 = sphi 0, %s35
      %p32 = scmp.ge.s32.totalorder %s31, 8
      %s41 = sphi 0, %s43
      %s44 = sphi 0, %s41
      %s45 = sphi 0, %s44
      %s61 = sphi 0, %s45
      %s69 = sphi 0, %s71
      %s72 = sphi 0, %s69
      %s73 = sphi 0, %s72
      %s89 = sphi 0, %s73
      %s95 = sphi 0, %s97
      %s98 = sphi 0, %s95
      %s99 = sphi 0, %s98
      %s115 = sphi 0, %s99
      %s121 = sphi 0, %s123
      %s124 = sphi 0, %s121
      %s125 = sphi 0, %s124
      %s141 = sphi 0, %s125
      %s147 = sphi 0, %s149
      %s150 = sphi 0, %s147
      %s151 = sphi 0, %s150
      %s167 = sphi 0, %s151
      %s175 = sphi 0, %s177
      %s178 = sphi 0, %s175
      %s179 = sphi 0, %s178
      %s195 = sphi 0, %s179
    $region4: #{tpu_custom_call.1} parent=1 // loop_header_branch
      %34 = sbr.rel (%p32) target = $region8
    $region5: #{tpu_custom_call.1} parent=1 // loop_body
      %s36 = ssub.s32 %s31, 1
      %s37 = ssub.s32 %s31, 2
      %s38 = sadd.s32 %s31, 1
      %s39 = ssub.s32 %s31, %s38
      %p40 = scmp.eq.s32.totalorder %s39, 0
      %s42 = sadd.s32 %s41, 1
      %s43 = scalar_select %p40, %s41, %s42
      %p46 = pneg %p40
      %p47 = scmp.eq.s32.totalorder %s31, 5
      %p48 = por %p46, %p47
      %p49 = scmp.ne.s32.totalorder %s41, %s44
      %p50 = scmp.eq.s32.totalorder %s31, 0
      %p51 = por %p49, %p50
      %p52 = scmp.ne.s32.totalorder %s41, %s44
      %p53 = scmp.eq.s32.totalorder %s36, 5
      %p54 = por %p52, %p53
      %p55 = scmp.ne.s32.totalorder %s44, %s45
      %p56 = scmp.eq.s32.totalorder %s36, 0
      %p57 = por %p55, %p56
      %p58 = scmp.ne.s32.totalorder %s44, %s45
      %p59 = scmp.eq.s32.totalorder %s37, 5
      %p60 = por %p58, %p59
      %p62 = scmp.ne.s32.totalorder %s45, %s61
      %p63 = scmp.eq.s32.totalorder %s37, 0
      %p64 = por %p62, %p63
      %s65 = sld [smem:[#allocation4 + %s31]]
      %s66 = sld [smem:[#allocation4 + %s38]]
      %s67 = ssub.s32 %s65, %s66
      %p68 = scmp.eq.s32.totalorder %s67, 0
      %s70 = sadd.s32 %s69, 1
      %s71 = scalar_select %p68, %s69, %s70
      %p74 = pneg %p68
      %p75 = scmp.eq.s32.totalorder %s31, 5
      %p76 = por %p74, %p75
      %p77 = scmp.ne.s32.totalorder %s69, %s72
      %p78 = scmp.eq.s32.totalorder %s31, 0
      %p79 = por %p77, %p78
      %p80 = scmp.ne.s32.totalorder %s69, %s72
      %p81 = scmp.eq.s32.totalorder %s36, 5
      %p82 = por %p80, %p81
      %p83 = scmp.ne.s32.totalorder %s72, %s73
      %p84 = scmp.eq.s32.totalorder %s36, 0
      %p85 = por %p83, %p84
      %p86 = scmp.ne.s32.totalorder %s72, %s73
      %p87 = scmp.eq.s32.totalorder %s37, 5
      %p88 = por %p86, %p87
      %p90 = scmp.ne.s32.totalorder %s73, %s89
      %p91 = scmp.eq.s32.totalorder %s37, 0
      %p92 = por %p90, %p91
      %s93 = ssub.s32 %s31, %s38
      %p94 = scmp.eq.s32.totalorder %s93, 0
      %s96 = sadd.s32 %s95, 1
      %s97 = scalar_select %p94, %s95, %s96
      %p100 = pneg %p94
      %p101 = scmp.eq.s32.totalorder %s31, 5
      %p102 = por %p100, %p101
      %p103 = scmp.ne.s32.totalorder %s95, %s98
      %p104 = scmp.eq.s32.totalorder %s31, 0
      %p105 = por %p103, %p104
      %p106 = scmp.ne.s32.totalorder %s95, %s98
      %p107 = scmp.eq.s32.totalorder %s36, 5
      %p108 = por %p106, %p107
      %p109 = scmp.ne.s32.totalorder %s98, %s99
      %p110 = scmp.eq.s32.totalorder %s36, 0
      %p111 = por %p109, %p110
      %p112 = scmp.ne.s32.totalorder %s98, %s99
      %p113 = scmp.eq.s32.totalorder %s37, 5
      %p114 = por %p112, %p113
      %p116 = scmp.ne.s32.totalorder %s99, %s115
      %p117 = scmp.eq.s32.totalorder %s37, 0
      %p118 = por %p116, %p117
      %s119 = ssub.s32 %s31, %s38
      %p120 = scmp.eq.s32.totalorder %s119, 0
      %s122 = sadd.s32 %s121, 1
      %s123 = scalar_select %p120, %s121, %s122
      %p126 = pneg %p120
      %p127 = scmp.eq.s32.totalorder %s31, 5
      %p128 = por %p126, %p127
      %p129 = scmp.ne.s32.totalorder %s121, %s124
      %p130 = scmp.eq.s32.totalorder %s31, 0
      %p131 = por %p129, %p130
      %p132 = scmp.ne.s32.totalorder %s121, %s124
      %p133 = scmp.eq.s32.totalorder %s36, 5
      %p134 = por %p132, %p133
      %p135 = scmp.ne.s32.totalorder %s124, %s125
      %p136 = scmp.eq.s32.totalorder %s36, 0
      %p137 = por %p135, %p136
      %p138 = scmp.ne.s32.totalorder %s124, %s125
      %p139 = scmp.eq.s32.totalorder %s37, 5
      %p140 = por %p138, %p139
      %p142 = scmp.ne.s32.totalorder %s125, %s141
      %p143 = scmp.eq.s32.totalorder %s37, 0
      %p144 = por %p142, %p143
      %s145 = ssub.s32 %s31, %s38
      %p146 = scmp.eq.s32.totalorder %s145, 0
      %s148 = sadd.s32 %s147, 1
      %s149 = scalar_select %p146, %s147, %s148
      %p152 = pneg %p146
      %p153 = scmp.eq.s32.totalorder %s31, 5
      %p154 = por %p152, %p153
      %p155 = scmp.ne.s32.totalorder %s147, %s150
      %p156 = scmp.eq.s32.totalorder %s31, 0
      %p157 = por %p155, %p156
      %p158 = scmp.ne.s32.totalorder %s147, %s150
      %p159 = scmp.eq.s32.totalorder %s36, 5
      %p160 = por %p158, %p159
      %p161 = scmp.ne.s32.totalorder %s150, %s151
      %p162 = scmp.eq.s32.totalorder %s36, 0
      %p163 = por %p161, %p162
      %p164 = scmp.ne.s32.totalorder %s150, %s151
      %p165 = scmp.eq.s32.totalorder %s37, 5
      %p166 = por %p164, %p165
      %p168 = scmp.ne.s32.totalorder %s151, %s167
      %p169 = scmp.eq.s32.totalorder %s37, 0
      %p170 = por %p168, %p169
      %s171 = sld [smem:[#allocation3 + %s31]]
      %s172 = sld [smem:[#allocation3 + %s38]]
      %s173 = ssub.s32 %s171, %s172
      %p174 = scmp.eq.s32.totalorder %s173, 0
      %s176 = sadd.s32 %s175, 1
      %s177 = scalar_select %p174, %s175, %s176
      %p180 = pneg %p174
      %p181 = scmp.eq.s32.totalorder %s31, 5
      %p182 = por %p180, %p181
      %p183 = scmp.ne.s32.totalorder %s175, %s178
      %p184 = scmp.eq.s32.totalorder %s31, 0
      %p185 = por %p183, %p184
      %p186 = scmp.ne.s32.totalorder %s175, %s178
      %p187 = scmp.eq.s32.totalorder %s36, 5
      %p188 = por %p186, %p187
      %p189 = scmp.ne.s32.totalorder %s178, %s179
      %p190 = scmp.eq.s32.totalorder %s36, 0
      %p191 = por %p189, %p190
      %p192 = scmp.ne.s32.totalorder %s178, %s179
      %p193 = scmp.eq.s32.totalorder %s37, 5
      %p194 = por %p192, %p193
      %p196 = scmp.ne.s32.totalorder %s179, %s195
      %p197 = scmp.eq.s32.totalorder %s37, 0
      %p198 = por %p196, %p197
      %p199 = scmp.le.s32.totalorder 1, %s31
      %p200 = scmp.lt.s32.totalorder %s31, 7
      %p201 = pnand %p199, %p200
      %p202 = pneg %p201
      // Predicated region
      $region9: #{tpu_custom_call.1} parent=5 // pred_check
        _
      $region10: #{tpu_custom_call.1} parent=5 // pred_check_branch
        %204 = sbr.rel (%p201) target = $region12
      $region11: #{tpu_custom_call.1} parent=5 // pred_region
        %s205 = ssub.s32 %s31, 1
      $region12: #{tpu_custom_call.1} parent=5 // pred_fallthru
        _
      %p206 = scmp.lt.s32.totalorder %s31, 6
      // Predicated region
      $region13: #{tpu_custom_call.1} parent=5 // pred_check
        %p207 = pneg %p206
      $region14: #{tpu_custom_call.1} parent=5 // pred_check_branch
        %209 = sbr.rel (%p207) target = $region16
      $region15: #{tpu_custom_call.1} parent=5 // pred_region
        // Predicated region
        $region17: #{tpu_custom_call.1} parent=15 // pred_check
          %p210 = pneg %p51
        $region18: #{tpu_custom_call.1} parent=15 // pred_check_branch
          %212 = sbr.rel (%p210) target = $region20
        $region19: #{tpu_custom_call.1} parent=15 // pred_region
          %p213 = scmp.lt.s32.totalorder %s31, 5
          %s214 = scalar_select %p213, %s31, 5
          %s215 = smul.addr %s214, 8
          %s216 = smul.addr %s215, 4
          %s217 = scalar_lea.vmem %s3, %s216
        $region20: #{tpu_custom_call.1} parent=15 // pred_fallthru
          _
        // Predicated region
        $region21: #{tpu_custom_call.1} parent=15 // pred_check
          %p218 = pneg %p79
        $region22: #{tpu_custom_call.1} parent=15 // pred_check_branch
          %220 = sbr.rel (%p218) target = $region24
        $region23: #{tpu_custom_call.1} parent=15 // pred_region
          %s221 = sld [smem:[#allocation4 + %s31]]
          %p222 = scmp.lt.s32.totalorder %s221, 2
          %s223 = scalar_select %p222, %s221, 2
          %s224 = smul.addr %s223, 8
          %s225 = smul.addr %s224, 4
          %s226 = scalar_lea.vmem %s4, %s225
          %s227 = sld [smem:[#allocation4 + %s31]]
        $region24: #{tpu_custom_call.1} parent=15 // pred_fallthru
          _
        // Predicated region
        $region25: #{tpu_custom_call.1} parent=15 // pred_check
          %p228 = pneg %p105
        $region26: #{tpu_custom_call.1} parent=15 // pred_check_branch
          %230 = sbr.rel (%p228) target = $region28
        $region27: #{tpu_custom_call.1} parent=15 // pred_region
          %p231 = scmp.lt.s32.totalorder %s31, 5
          %s232 = scalar_select %p231, %s31, 5
          %s233 = smul.addr %s232, 4
          %s234 = smul.addr %s233, 4
          %s235 = scalar_lea.vmem %s5, %s234
        $region28: #{tpu_custom_call.1} parent=15 // pred_fallthru
          _
        // Predicated region
        $region29: #{tpu_custom_call.1} parent=15 // pred_check
          %p236 = pneg %p131
        $region30: #{tpu_custom_call.1} parent=15 // pred_check_branch
          %238 = sbr.rel (%p236) target = $region32
        $region31: #{tpu_custom_call.1} parent=15 // pred_region
          %p239 = scmp.lt.s32.totalorder %s31, 5
          %s240 = scalar_select %p239, %s31, 5
          %s241 = scalar_lea.vmem %s6, %s240
        $region32: #{tpu_custom_call.1} parent=15 // pred_fallthru
          _
        // Predicated region
        $region33: #{tpu_custom_call.1} parent=15 // pred_check
          %p242 = pneg %p157
        $region34: #{tpu_custom_call.1} parent=15 // pred_check_branch
          %244 = sbr.rel (%p242) target = $region36
        $region35: #{tpu_custom_call.1} parent=15 // pred_region
          %p245 = scmp.lt.s32.totalorder %s31, 5
          %s246 = scalar_select %p245, %s31, 5
          %s247 = smul.addr %s246, 8
          %s248 = smul.addr %s247, 8
          %s249 = scalar_lea.vmem %s7, %s248
        $region36: #{tpu_custom_call.1} parent=15 // pred_fallthru
          _
      $region16: #{tpu_custom_call.1} parent=5 // pred_fallthru
        _
      %p250 = scmp.le.s32.totalorder 1, %s31
      %p251 = scmp.lt.s32.totalorder %s31, 7
      %p252 = pnand %p250, %p251
      %p253 = pneg %p252
      // Predicated region
      $region37: #{tpu_custom_call.1} parent=5 // pred_check
        _
      $region38: #{tpu_custom_call.1} parent=5 // pred_check_branch
        %255 = sbr.rel (%p252) target = $region40
      $region39: #{tpu_custom_call.1} parent=5 // pred_region
        %s256 = ssub.s32 %s31, 1
        %p257 = scmp.lt.s32.totalorder %s36, 5
        %s258 = scalar_select %p257, %s36, 5
        %s259 = smul.addr %s258, 8
        %s260 = smul.addr %s259, 4
        %s261 = scalar_lea.vmem %s3, %s260
        %p262 = pneg %p57
        %p263 = pneg %p54
        %s264 = sld [smem:[#allocation4 + %s36]]
        %p265 = scmp.lt.s32.totalorder %s264, 2
        %s266 = scalar_select %p265, %s264, 2
        %s267 = smul.addr %s266, 8
        %s268 = smul.addr %s267, 4
        %s269 = scalar_lea.vmem %s4, %s268
        %p270 = pneg %p85
        %p271 = pneg %p82
        %p272 = scmp.lt.s32.totalorder %s36, 5
        %s273 = scalar_select %p272, %s36, 5
        %s274 = smul.addr %s273, 4
        %s275 = smul.addr %s274, 4
        %s276 = scalar_lea.vmem %s5, %s275
        %p277 = pneg %p111
        %p278 = pneg %p108
        %p279 = scmp.lt.s32.totalorder %s36, 5
        %s280 = scalar_select %p279, %s36, 5
        %s281 = scalar_lea.vmem %s6, %s280
        %p282 = pneg %p137
        %p283 = pneg %p134
        %p284 = scmp.lt.s32.totalorder %s36, 5
        %s285 = scalar_select %p284, %s36, 5
        %s286 = smul.addr %s285, 8
        %s287 = smul.addr %s286, 8
        %s288 = scalar_lea.vmem %s7, %s287
        %p289 = pneg %p163
        %p290 = pneg %p160
        %p291 = pneg %p191
        %p292 = pneg %p188
        %s293 = sand.u32 %s178, 1
        %s294 = scalar_lea.sflag [#allocation7], %s293
        %s295 = sand.u32 %s178, 1
        %s296 = smul.addr %s295, 64
        %s297 = scalar_lea.vmem [#allocation6], %s296
        %p298 = scmp.lt.s32.totalorder %s36, 5
        %s299 = scalar_select %p298, %s36, 5
        %s300 = smul.addr %s299, 8
        %s301 = smul.addr %s300, 4
        %s302 = scalar_lea.vmem %s3, %s301
        %s303 = sld [smem:[#allocation4 + %s36]]
        %p304 = scmp.lt.s32.totalorder %s303, 2
        %s305 = scalar_select %p304, %s303, 2
        %s306 = smul.addr %s305, 8
        %s307 = smul.addr %s306, 4
        %s308 = scalar_lea.vmem %s4, %s307
        %s309 = sld [smem:[#allocation4 + %s36]]
        %p310 = scmp.lt.s32.totalorder %s36, 5
        %s311 = scalar_select %p310, %s36, 5
        %s312 = smul.addr %s311, 4
        %s313 = smul.addr %s312, 4
        %s314 = scalar_lea.vmem %s5, %s313
        %p315 = scmp.lt.s32.totalorder %s36, 5
        %s316 = scalar_select %p315, %s36, 5
        %s317 = scalar_lea.vmem %s6, %s316
        %p318 = scmp.lt.s32.totalorder %s36, 5
        %s319 = scalar_select %p318, %s36, 5
        %s320 = smul.addr %s319, 8
        %s321 = smul.addr %s320, 8
        %s322 = scalar_lea.vmem %s7, %s321
        %s323 = sld [smem:[#allocation3 + %s36]]
        %s325 = sld [smem:[#allocation5 + %s36]]
        %p326 = scmp.eq.s32.totalorder %s325, 1
        // Predicated region
        $region41: #{tpu_custom_call.1} parent=39 // pred_check
          %p327 = pneg %p326
        $region42: #{tpu_custom_call.1} parent=39 // pred_check_branch
          %329 = sbr.rel (%p327) target = $region44
        $region43: #{tpu_custom_call.1} parent=39 // pred_region
          %330 = vst [vmem:[%s297] sm:$0xff] 0.0
          %331 = vst [vmem:[%s297 + $0x8] sm:$0xff] 0.0
          %332 = vst [vmem:[%s297 + $0x10] sm:$0xff] 0.0
          %333 = vst [vmem:[%s297 + $0x18] sm:$0xff] 0.0
          %334 = vst [vmem:[%s297 + $0x20] sm:$0xff] 0.0
          %335 = vst [vmem:[%s297 + $0x28] sm:$0xff] 0.0
          %336 = vst [vmem:[%s297 + $0x30] sm:$0xff] 0.0
          %337 = vst [vmem:[%s297 + $0x38] sm:$0xff] 0.0
        $region44: #{tpu_custom_call.1} parent=39 // pred_fallthru
          _
        %v338 = vld [vmem:[%s308] sm:$0xf]
        %v339 = vld [vmem:[%s308 + $0x4] sm:$0xf]
        %v340 = vld [vmem:[%s308 + $0x8] sm:$0xf]
        %v341 = vld [vmem:[%s308 + $0xc] sm:$0xf]
        %v342 = vld [vmem:[%s308 + $0x10] sm:$0xf]
        %v343 = vld [vmem:[%s308 + $0x14] sm:$0xf]
        %v344 = vld [vmem:[%s308 + $0x18] sm:$0xf]
        %v345 = vld [vmem:[%s308 + $0x1c] sm:$0xf]
        %v346 = vld [vmem:[%s314] sm:$0xf]
        %v347 = vld [vmem:[%s314 + $0x4] sm:$0xf]
        %v348 = vld [vmem:[%s314 + $0x8] sm:$0xf]
        %v349 = vld [vmem:[%s314 + $0xc] sm:$0xf]
        %v358 = vunpack.c.l.b16 %v338
        %v359 = vunpack.c.l.b16 %v339
        %v360 = vunpack.c.l.b16 %v340
        %v361 = vunpack.c.l.b16 %v341
        %v362 = vunpack.c.l.b16 %v342
        %v363 = vunpack.c.l.b16 %v343
        %v364 = vunpack.c.l.b16 %v344
        %v365 = vunpack.c.l.b16 %v345
        %v366 = vpack.c.b16 %v359, %v358
        %v367 = vpack.c.b16 %v361, %v360
        %v368 = vpack.c.b16 %v363, %v362
        %v369 = vpack.c.b16 %v365, %v364
        %v374 = vunpack.c.l.b16 %v346
        %v375 = vunpack.c.l.b16 %v347
        %v376 = vunpack.c.l.b16 %v348
        %v377 = vunpack.c.l.b16 %v349
        %v378 = vpack.c.b16 %v375, %v374
        %v379 = vpack.c.b16 %v377, %v376
        %vm382 = vcmask 261120
        %v384 = vsel %vm382, %v366, 0
        %v387 = vsel %vm382, %v367, 0
        %v390 = vsel %vm382, %v368, 0
        %v393 = vsel %vm382, %v369, 0
        %395 = vmatprep.subr.bf16.mxu0 0
        %396 = vmatpush1.bf16.msra.mxu0 %v378
        %397 = vmatprep.subr.bf16.mxu0 0
        %398 = vmatpush1.bf16.msra.mxu0 %v379
        %399 = vmatprep.subr.bf16.mxu0 0
        %400 = vmatpush1.bf16.msra.mxu0 0
        %401 = vmatprep.subr.bf16.mxu0 0
        %402 = vmatpush1.bf16.msra.mxu0 0
        %403 = vmatprep.subr.bf16.mxu0 0
        %404 = vmatpush1.bf16.msra.mxu0 0
        %405 = vmatprep.subr.bf16.mxu0 0
        %406 = vmatpush1.bf16.msra.mxu0 0
        %407 = vmatprep.subr.bf16.mxu0 0
        %408 = vmatpush1.bf16.msra.mxu0 0
        %409 = vmatprep.subr.bf16.mxu0 0
        %410 = vmatpush1.bf16.msra.mxu0 0
        %411 = vmatprep.subr.bf16.mxu0 0
        %412 = vmatpush1.bf16.msra.mxu0 0
        %413 = vmatprep.subr.bf16.mxu0 0
        %414 = vmatpush1.bf16.msra.mxu0 0
        %415 = vmatprep.subr.bf16.mxu0 0
        %416 = vmatpush1.bf16.msra.mxu0 0
        %417 = vmatprep.subr.bf16.mxu0 0
        %418 = vmatpush1.bf16.msra.mxu0 0
        %419 = vmatprep.subr.bf16.mxu0 0
        %420 = vmatpush1.bf16.msra.mxu0 0
        %421 = vmatprep.subr.bf16.mxu0 0
        %422 = vmatpush1.bf16.msra.mxu0 0
        %423 = vmatprep.subr.bf16.mxu0 0
        %424 = vmatpush1.bf16.msra.mxu0 0
        %425 = vmatprep.subr.bf16.mxu0 0
        %426 = vmatpush1.bf16.msra.mxu0 0
        %427 = vmatprep.mubr.bf16.mxu0 0
        %428 = vmatmul.mubr.bf16.gmra.mrb[0].mxu0 %v384
        %v429 = vpop.f32.mrb[0].mxu0
        %v430 = vadd.f32 0.0, %v429
        %v431 = vpop.f32.mrb[0].mxu0
        %v432 = vpop.f32.mrb[0].mxu0
        %v433 = vadd.f32 0.0, %v432
        %v434 = vpop.f32.mrb[0].mxu0
        %435 = vmatprep.mubr.bf16.mxu0 0
        %436 = vmatmul.mubr.bf16.gmra.mrb[0].mxu0 %v387
        %v437 = vpop.f32.mrb[0].mxu0
        %v438 = vadd.f32 0.0, %v437
        %v439 = vpop.f32.mrb[0].mxu0
        %v440 = vpop.f32.mrb[0].mxu0
        %v441 = vadd.f32 0.0, %v440
        %v442 = vpop.f32.mrb[0].mxu0
        %443 = vmatprep.mubr.bf16.mxu0 0
        %444 = vmatmul.mubr.bf16.gmra.mrb[0].mxu0 %v390
        %v445 = vpop.f32.mrb[0].mxu0
        %v446 = vadd.f32 0.0, %v445
        %v447 = vpop.f32.mrb[0].mxu0
        %v448 = vpop.f32.mrb[0].mxu0
        %v449 = vadd.f32 0.0, %v448
        %v450 = vpop.f32.mrb[0].mxu0
        %451 = vmatprep.mubr.bf16.mxu0 0
        %452 = vmatmul.mubr.bf16.gmra.mrb[0].mxu0 %v393
        %v453 = vpop.f32.mrb[0].mxu0
        %v454 = vadd.f32 0.0, %v453
        %v455 = vpop.f32.mrb[0].mxu0
        %v456 = vpop.f32.mrb[0].mxu0
        %v457 = vadd.f32 0.0, %v456
        %v458 = vpop.f32.mrb[0].mxu0
        %459 = vdwg.mxu0
        %v460 = vld [vmem:[%s302] sm:$0xf]
        %v461 = vld [vmem:[%s302 + $0x4] sm:$0xf]
        %v462 = vld [vmem:[%s302 + $0x8] sm:$0xf]
        %v463 = vld [vmem:[%s302 + $0xc] sm:$0xf]
        %v464 = vld [vmem:[%s302 + $0x10] sm:$0xf]
        %v465 = vld [vmem:[%s302 + $0x14] sm:$0xf]
        %v466 = vld [vmem:[%s302 + $0x18] sm:$0xf]
        %v467 = vld [vmem:[%s302 + $0x1c] sm:$0xf]
        %v468 = vpack.c.bf16 %v433, %v430
        %v469 = vpack.c.bf16 %v441, %v438
        %v470 = vpack.c.bf16 %v449, %v446
        %v471 = vpack.c.bf16 %v457, %v454
        %v480 = vunpack.c.l.b16 %v460
        %v481 = vunpack.c.l.b16 %v461
        %v482 = vunpack.c.l.b16 %v462
        %v483 = vunpack.c.l.b16 %v463
        %v484 = vunpack.c.l.b16 %v464
        %v485 = vunpack.c.l.b16 %v465
        %v486 = vunpack.c.l.b16 %v466
        %v487 = vunpack.c.l.b16 %v467
        %v488 = vpack.c.b16 %v481, %v480
        %v489 = vpack.c.b16 %v483, %v482
        %v490 = vpack.c.b16 %v485, %v484
        %v491 = vpack.c.b16 %v487, %v486
        %vm492 = vcmask 523264
        %v494 = vsel %vm492, %v488, 0
        %v497 = vsel %vm492, %v489, 0
        %v500 = vsel %vm492, %v490, 0
        %v503 = vsel %vm492, %v491, 0
        %505 = vmatprep.subr.bf16.mxu0 0
        %506 = vmatpush1.bf16.msra.mxu0 %v468
        %507 = vmatprep.subr.bf16.mxu0 0
        %508 = vmatpush1.bf16.msra.mxu0 %v469
        %509 = vmatprep.subr.bf16.mxu0 0
        %510 = vmatpush1.bf16.msra.mxu0 %v470
        %511 = vmatprep.subr.bf16.mxu0 0
        %512 = vmatpush1.bf16.msra.mxu0 %v471
        %513 = vmatprep.subr.bf16.mxu0 0
        %514 = vmatpush1.bf16.msra.mxu0 0
        %515 = vmatprep.subr.bf16.mxu0 0
        %516 = vmatpush1.bf16.msra.mxu0 0
        %517 = vmatprep.subr.bf16.mxu0 0
        %518 = vmatpush1.bf16.msra.mxu0 0
        %519 = vmatprep.subr.bf16.mxu0 0
        %520 = vmatpush1.bf16.msra.mxu0 0
        %521 = vmatprep.subr.bf16.mxu0 0
        %522 = vmatpush1.bf16.msra.mxu0 0
        %523 = vmatprep.subr.bf16.mxu0 0
        %524 = vmatpush1.bf16.msra.mxu0 0
        %525 = vmatprep.subr.bf16.mxu0 0
        %526 = vmatpush1.bf16.msra.mxu0 0
        %527 = vmatprep.subr.bf16.mxu0 0
        %528 = vmatpush1.bf16.msra.mxu0 0
        %529 = vmatprep.subr.bf16.mxu0 0
        %530 = vmatpush1.bf16.msra.mxu0 0
        %531 = vmatprep.subr.bf16.mxu0 0
        %532 = vmatpush1.bf16.msra.mxu0 0
        %533 = vmatprep.subr.bf16.mxu0 0
        %534 = vmatpush1.bf16.msra.mxu0 0
        %535 = vmatprep.subr.bf16.mxu0 0
        %536 = vmatpush1.bf16.msra.mxu0 0
        %537 = vmatprep.mubr.bf16.mxu0 0
        %538 = vmatmul.mubr.bf16.gmra.mrb[0].mxu0 %v494
        %v539 = vpop.f32.mrb[0].mxu0
        %v540 = vadd.f32 0.0, %v539
        %v541 = vpop.f32.mrb[0].mxu0
        %v542 = vpop.f32.mrb[0].mxu0
        %v543 = vadd.f32 0.0, %v542
        %v544 = vpop.f32.mrb[0].mxu0
        %545 = vmatprep.mubr.bf16.mxu0 0
        %546 = vmatmul.mubr.bf16.gmra.mrb[0].mxu0 %v497
        %v547 = vpop.f32.mrb[0].mxu0
        %v548 = vadd.f32 0.0, %v547
        %v549 = vpop.f32.mrb[0].mxu0
        %v550 = vpop.f32.mrb[0].mxu0
        %v551 = vadd.f32 0.0, %v550
        %v552 = vpop.f32.mrb[0].mxu0
        %553 = vmatprep.mubr.bf16.mxu0 0
        %554 = vmatmul.mubr.bf16.gmra.mrb[0].mxu0 %v500
        %v555 = vpop.f32.mrb[0].mxu0
        %v556 = vadd.f32 0.0, %v555
        %v557 = vpop.f32.mrb[0].mxu0
        %v558 = vpop.f32.mrb[0].mxu0
        %v559 = vadd.f32 0.0, %v558
        %v560 = vpop.f32.mrb[0].mxu0
        %561 = vmatprep.mubr.bf16.mxu0 0
        %562 = vmatmul.mubr.bf16.gmra.mrb[0].mxu0 %v503
        %v563 = vpop.f32.mrb[0].mxu0
        %v564 = vadd.f32 0.0, %v563
        %v565 = vpop.f32.mrb[0].mxu0
        %v566 = vpop.f32.mrb[0].mxu0
        %v567 = vadd.f32 0.0, %v566
        %v568 = vpop.f32.mrb[0].mxu0
        %569 = vdwg.mxu0
        %v570 = vld [vmem:[%s322] sm:$0xff]
        %v571 = vld [vmem:[%s322 + $0x8] sm:$0xff]
        %v572 = vld [vmem:[%s322 + $0x10] sm:$0xff]
        %v573 = vld [vmem:[%s322 + $0x18] sm:$0xff]
        %v574 = vld [vmem:[%s322 + $0x20] sm:$0xff]
        %v575 = vld [vmem:[%s322 + $0x28] sm:$0xff]
        %v576 = vld [vmem:[%s322 + $0x30] sm:$0xff]
        %v577 = vld [vmem:[%s322 + $0x38] sm:$0xff]
        %vm578 = vcmp.gt.f32.partialorder %v570, 0.0
        %vm579 = vcmp.gt.f32.partialorder %v571, 0.0
        %vm580 = vcmp.gt.f32.partialorder %v572, 0.0
        %vm581 = vcmp.gt.f32.partialorder %v573, 0.0
        %vm582 = vcmp.gt.f32.partialorder %v574, 0.0
        %vm583 = vcmp.gt.f32.partialorder %v575, 0.0
        %vm584 = vcmp.gt.f32.partialorder %v576, 0.0
        %vm585 = vcmp.gt.f32.partialorder %v577, 0.0
        %v586 = vsel %vm578, 1, 0
        %v587 = vsel %vm579, 1, 0
        %v588 = vsel %vm580, 1, 0
        %v589 = vsel %vm581, 1, 0
        %v590 = vsel %vm582, 1, 0
        %v591 = vsel %vm583, 1, 0
        %v592 = vsel %vm584, 1, 0
        %v593 = vsel %vm585, 1, 0
        %v594 = vcvt.s32.f32 %v586
        %v595 = vcvt.s32.f32 %v587
        %v596 = vcvt.s32.f32 %v588
        %v597 = vcvt.s32.f32 %v589
        %v598 = vcvt.s32.f32 %v590
        %v599 = vcvt.s32.f32 %v591
        %v600 = vcvt.s32.f32 %v592
        %v601 = vcvt.s32.f32 %v593
        %603 = vset.pattern.permute.xlu0 0
        %604 = vperm.xlu0 %603, %v570
        %v605 = vpop.permute.xlu0 %604
        %608 = vset.pattern.permute.xlu0 0
        %609 = vperm.xlu0 %608, %v571
        %v610 = vpop.permute.xlu0 %609
        %613 = vset.pattern.permute.xlu0 0
        %614 = vperm.xlu0 %613, %v572
        %v615 = vpop.permute.xlu0 %614
        %618 = vset.pattern.permute.xlu0 0
        %619 = vperm.xlu0 %618, %v573
        %v620 = vpop.permute.xlu0 %619
        %623 = vset.pattern.permute.xlu0 0
        %624 = vperm.xlu0 %623, %v574
        %v625 = vpop.permute.xlu0 %624
        %628 = vset.pattern.permute.xlu0 0
        %629 = vperm.xlu0 %628, %v575
        %v630 = vpop.permute.xlu0 %629
        %633 = vset.pattern.permute.xlu0 0
        %634 = vperm.xlu0 %633, %v576
        %v635 = vpop.permute.xlu0 %634
        %638 = vset.pattern.permute.xlu0 0
        %639 = vperm.xlu0 %638, %v577
        %v640 = vpop.permute.xlu0 %639
        %v642 = vmul.f32 %v540, %v605
        %v643 = vmul.f32 %v543, %v610
        %v644 = vmul.f32 %v548, %v615
        %v645 = vmul.f32 %v551, %v620
        %v646 = vmul.f32 %v556, %v625
        %v647 = vmul.f32 %v559, %v630
        %v648 = vmul.f32 %v564, %v635
        %v649 = vmul.f32 %v567, %v640
        %v650 = vld [vmem:[%s317] sm:$0x1]
        %v652 = vlaneseq
        %v653 = vshrl.u32 %v652, 7
        %v654 = vsub.s32 0, %v653
        %v655 = vrot.slane %v650, %v654
        %658 = vset.pattern.permute.xlu0 0
        %659 = vperm.xlu0 %658, %v594
        %v660 = vpop.permute.xlu0 %659
        %663 = vset.pattern.permute.xlu0 0
        %664 = vperm.xlu0 %663, %v595
        %v665 = vpop.permute.xlu0 %664
        %668 = vset.pattern.permute.xlu0 0
        %669 = vperm.xlu0 %668, %v596
        %v670 = vpop.permute.xlu0 %669
        %673 = vset.pattern.permute.xlu0 0
        %674 = vperm.xlu0 %673, %v597
        %v675 = vpop.permute.xlu0 %674
        %678 = vset.pattern.permute.xlu0 0
        %679 = vperm.xlu0 %678, %v598
        %v680 = vpop.permute.xlu0 %679
        %683 = vset.pattern.permute.xlu0 0
        %684 = vperm.xlu0 %683, %v599
        %v685 = vpop.permute.xlu0 %684
        %688 = vset.pattern.permute.xlu0 0
        %689 = vperm.xlu0 %688, %v600
        %v690 = vpop.permute.xlu0 %689
        %693 = vset.pattern.permute.xlu0 0
        %694 = vperm.xlu0 %693, %v601
        %v695 = vpop.permute.xlu0 %694
        %v697 = vmul.f32 %v655, %v660
        %v698 = vmul.f32 %v655, %v665
        %v699 = vmul.f32 %v655, %v670
        %v700 = vmul.f32 %v655, %v675
        %v701 = vmul.f32 %v655, %v680
        %v702 = vmul.f32 %v655, %v685
        %v703 = vmul.f32 %v655, %v690
        %v704 = vmul.f32 %v655, %v695
        %v705 = vadd.f32 %v642, %v697
        %v706 = vadd.f32 %v643, %v698
        %v707 = vadd.f32 %v644, %v699
        %v708 = vadd.f32 %v645, %v700
        %v709 = vadd.f32 %v646, %v701
        %v710 = vadd.f32 %v647, %v702
        %v711 = vadd.f32 %v648, %v703
        %v712 = vadd.f32 %v649, %v704
        %v713 = vld [vmem:[%s297] sm:$0xff]
        %v714 = vld [vmem:[%s297 + $0x8] sm:$0xff]
        %v715 = vld [vmem:[%s297 + $0x10] sm:$0xff]
        %v716 = vld [vmem:[%s297 + $0x18] sm:$0xff]
        %v717 = vld [vmem:[%s297 + $0x20] sm:$0xff]
        %v718 = vld [vmem:[%s297 + $0x28] sm:$0xff]
        %v719 = vld [vmem:[%s297 + $0x30] sm:$0xff]
        %v720 = vld [vmem:[%s297 + $0x38] sm:$0xff]
        %v721 = vadd.f32 %v713, %v705
        %v722 = vadd.f32 %v714, %v706
        %v723 = vadd.f32 %v715, %v707
        %v724 = vadd.f32 %v716, %v708
        %v725 = vadd.f32 %v717, %v709
        %v726 = vadd.f32 %v718, %v710
        %v727 = vadd.f32 %v719, %v711
        %v728 = vadd.f32 %v720, %v712
        %729 = vst [vmem:[%s297] sm:$0xff] %v721
        %730 = vst [vmem:[%s297 + $0x8] sm:$0xff] %v722
        %731 = vst [vmem:[%s297 + $0x10] sm:$0xff] %v723
        %732 = vst [vmem:[%s297 + $0x18] sm:$0xff] %v724
        %733 = vst [vmem:[%s297 + $0x20] sm:$0xff] %v725
        %734 = vst [vmem:[%s297 + $0x28] sm:$0xff] %v726
        %735 = vst [vmem:[%s297 + $0x30] sm:$0xff] %v727
        %736 = vst [vmem:[%s297 + $0x38] sm:$0xff] %v728
        %s737 = sand.u32 %s178, 1
        %s738 = scalar_lea.sflag [#allocation7], %s737
        %s739 = sand.u32 %s178, 1
        %s740 = smul.addr %s739, 64
        %s741 = scalar_lea.vmem [#allocation6], %s740
        // Predicated region
        $region45: #{tpu_custom_call.1} parent=39 // pred_check
          %p742 = pneg %p188
        $region46: #{tpu_custom_call.1} parent=39 // pred_check_branch
          %744 = sbr.rel (%p742) target = $region48
        $region47: #{tpu_custom_call.1} parent=39 // pred_region
          %s745 = sld [smem:[#allocation3 + %s36]]
          %s747 = ssub.s32 1024, 1024
          %748 = vsyncadd %s738, %s747
          %s749 = smul.addr %s745, 8
          %s750 = smul.addr %s749, 128
          %s751 = scalar_lea.hbm %s8, %s750
          %s752 = sshll.u32 %s741, 4
          %s753 = int_to_ptr.vmem [resolvable:$true] %s752
          %758 = dma.vmem_to_hbm [thread:$0]  %s753, 1024, %s751, %s738, 128, 128, 8
        $region48: #{tpu_custom_call.1} parent=39 // pred_fallthru
          _
      $region40: #{tpu_custom_call.1} parent=5 // pred_fallthru
        _
      %p759 = scmp.le.s32.totalorder 2, %s31
      // Predicated region
      $region49: #{tpu_custom_call.1} parent=5 // pred_check
        %p760 = pneg %p759
      $region50: #{tpu_custom_call.1} parent=5 // pred_check_branch
        %762 = sbr.rel (%p760) target = $region52
      $region51: #{tpu_custom_call.1} parent=5 // pred_region
        %s763 = ssub.s32 %s31, 2
        // Predicated region
        $region53: #{tpu_custom_call.1} parent=51 // pred_check
          %p764 = pneg %p194
        $region54: #{tpu_custom_call.1} parent=51 // pred_check_branch
          %766 = sbr.rel (%p764) target = $region56
        $region55: #{tpu_custom_call.1} parent=51 // pred_region
          %s767 = sand.u32 %s179, 1
          %s768 = scalar_lea.sflag [#allocation7], %s767
          %s769 = sand.u32 %s179, 1
          %s770 = smul.addr %s769, 64
          %s771 = scalar_lea.vmem [#allocation6], %s770
          %772 = dma.done %s768, 1024
        $region56: #{tpu_custom_call.1} parent=51 // pred_fallthru
          _
      $region52: #{tpu_custom_call.1} parent=5 // pred_fallthru
        _
    $region6: #{tpu_custom_call.1} parent=1 // loop_footer
      %s35 = sadd.s32 1, %s31
    $region7: #{tpu_custom_call.1} parent=1 // loop_footer_branch
      %30 = sbr.rel target = $region3
    $region8: #{tpu_custom_call.1} parent=1 // loop_exit
      _
    %773 = vsyncpa [#allocation7], 1
    %s774 = scalar_lea.sflag [#allocation7], 1
    %775 = vsyncpa %s774, 1

</llo_original>
